<compile_context>
chip_gen: v6e
topology: v6e:2x2x1
jax: 0.10.0
libtpu: 0.0.40
codegen_flags: <defaults>
</compile_context>

<pallas_src>
import math

import jax
import jax.numpy as jnp
from jax.experimental import pallas as pl
from jax.experimental.pallas import tpu as pltpu

# Scaled-down dims preserving the module's structure
# (real model: D_TEXT=768, D_IMG=2048, E=2816, num_heads=8, 7x7=49 positions).
B = 8                          # >=8 rows keeps the MXU LHS sublane-aligned
S_TEXT = 8
D_TEXT = 128
D_IMG = 128
HW = 49                        # 7 * 7 spatial positions
E = D_TEXT + D_IMG             # MultiheadAttention embed_dim
NUM_HEADS = 8
HEAD_DIM = E // NUM_HEADS      # per-head dim (never needed: attn weights == 1)
NUM_LABELS = 3
NL_PAD = 128                   # lane-dense padded classifier width
TN = 128                       # weight column tile (real dims: 512 v6e/v7x, 256 v5e)


def _attention_kernel(text_ref, img_ref, wv_ref, bv_ref, wo_ref, bo_ref,
                      wc_ref, bc_ref, out_ref, x_sc, acc_sc):
    j = pl.program_id(0)
    last = pl.num_programs(0) - 1

    @pl.when(j == 0)
    def _init():
        # text_feature = text_output.last_hidden_state[:, 0, :] (CLS row,
        # sliced in the wrapper so only (B, D_TEXT) is DMA'd).
        # img_feature = visual.last_hidden_state.view(-1, 49, D_IMG).max(1)[0]
        img_feat = jnp.max(img_ref[...], axis=1)                  # (B, D_IMG) f32
        x = jnp.concatenate([text_ref[...], img_feat], axis=-1)   # (B, E) f32
        x_sc[...] = x.astype(x_sc.dtype)        # bf16 copy: pure MXU operand
        acc_sc[...] = jnp.zeros_like(acc_sc)    # f32 attn-output accumulator

    # --- fused V-projection + output-projection, one weight tile per step ---
    # softmax over the length-1 key axis is exactly 1, so per-head attention
    # output == V; Q/K are never computed.
    #   v[:, tile]   = x @ Wv^T[:, tile] + bv[tile]
    #   acc         += v[:, tile] @ Wo^T[tile, :]
    v_tile = jnp.dot(x_sc[...], wv_ref[...],
                     preferred_element_type=jnp.float32) + bv_ref[...]  # (B, TN) f32
    acc_sc[...] += jnp.dot(v_tile.astype(jnp.bfloat16), wo_ref[...],
                           preferred_element_type=jnp.float32)          # (B, E) f32

    @pl.when(j == last)
    def _finalize():
        attn_out = acc_sc[...] + bo_ref[...]                            # (B, E) f32
        # classifier head (weight padded to a lane-dense 128-wide output)
        out_ref[...] = jnp.dot(attn_out.astype(jnp.bfloat16), wc_ref[...],
                               preferred_element_type=jnp.float32) + bc_ref[...]


def init_params(key):
    """Parameters mirroring nn.MultiheadAttention(E, 8) + classifier Linear."""
    ks = jax.random.split(key, 6)

    def u(k, shape, fan_in):
        bound = 1.0 / math.sqrt(fan_in)
        return jax.random.uniform(k, shape, jnp.float32, -bound, bound)

    return {
        "in_proj_w": u(ks[0], (3 * E, E), E),          # MHA packed QKV weight
        "in_proj_b": u(ks[1], (3 * E,), E),
        "out_proj_w": u(ks[2], (E, E), E),             # MHA output projection
        "out_proj_b": u(ks[3], (E,), E),
        "cls_w": u(ks[4], (NUM_LABELS, E), E),         # classifier Linear
        "cls_b": u(ks[5], (NUM_LABELS,), E),
    }


def attention_forward(text_hidden, image_hidden_nchw, params, *, tn=TN):
    assert E % tn == 0
    nt = E // tn

    # Only the CLS row is ever read -> do not DMA the rest of the sequence.
    text_cls = text_hidden[:, 0, :]                                   # (B, D_TEXT)
    # Same raw row-major reinterpretation as torch's .view(-1, 49, D_IMG)
    # on an NCHW tensor (mirrors the original module; likely an upstream bug,
    # faithfully reproduced here).
    img_seq = image_hidden_nchw.reshape(B, HW, D_IMG)

    # V third of the packed in-projection (Q/K unused: length-1 softmax == 1).
    # Weights streamed in bf16; biases kept f32.
    wv_t = params["in_proj_w"][2 * E:, :].T.astype(jnp.bfloat16)      # (E, E)
    bv = params["in_proj_b"][2 * E:].reshape(1, E).astype(jnp.float32)
    wo_t = params["out_proj_w"].T.astype(jnp.bfloat16)                # (E, E)
    bo = params["out_proj_b"].reshape(1, E).astype(jnp.float32)
    # Classifier weight/bias padded to a lane-dense 128-wide output slab.
    wc_t = jnp.zeros((E, NL_PAD), jnp.bfloat16).at[:, :NUM_LABELS].set(
        params["cls_w"].T.astype(jnp.bfloat16))
    bc = jnp.zeros((1, NL_PAD), jnp.float32).at[0, :NUM_LABELS].set(
        params["cls_b"])

    out = pl.pallas_call(
        _attention_kernel,
        out_shape=jax.ShapeDtypeStruct((B, NL_PAD), jnp.float32),
        grid_spec=pltpu.PrefetchScalarGridSpec(
            num_scalar_prefetch=0,
            grid=(nt,),
            in_specs=[
                pl.BlockSpec((B, D_TEXT), lambda j: (0, 0)),        # CLS row
                pl.BlockSpec((B, HW, D_IMG), lambda j: (0, 0, 0)),  # image seq
                pl.BlockSpec((E, tn), lambda j: (0, j)),            # Wv^T col tile
                pl.BlockSpec((1, tn), lambda j: (0, j)),            # bv tile
                pl.BlockSpec((tn, E), lambda j: (j, 0)),            # Wo^T row tile
                pl.BlockSpec((1, E), lambda j: (0, 0)),             # bo (resident)
                pl.BlockSpec((E, NL_PAD), lambda j: (0, 0)),        # classifier W
                pl.BlockSpec((1, NL_PAD), lambda j: (0, 0)),        # classifier b
            ],
            out_specs=pl.BlockSpec((B, NL_PAD), lambda j: (0, 0)),
            scratch_shapes=[
                pltpu.VMEM((B, E), jnp.bfloat16),   # x = concat(text, img), MXU operand
                pltpu.VMEM((B, E), jnp.float32),    # attention-output accumulator
            ],
        ),
        compiler_params=pltpu.CompilerParams(
            # single axis is a reduction over weight tiles -> "arbitrary"
            dimension_semantics=("arbitrary",),
        ),
    )(text_cls, img_seq, wv_t, bv, wo_t, bo, wc_t, bc)

    return out[:, :NUM_LABELS]


def reference_forward(text_hidden, image_hidden_nchw, params):
    """Pure-JAX reference using the same bf16-weight / f32-accumulate recipe."""
    text_feat = text_hidden[:, 0, :]
    img_feat = jnp.max(image_hidden_nchw.reshape(B, HW, D_IMG), axis=1)
    x = jnp.concatenate([text_feat, img_feat], axis=-1)

    wv = params["in_proj_w"][2 * E:, :].astype(jnp.bfloat16)
    bv = params["in_proj_b"][2 * E:]
    wo = params["out_proj_w"].astype(jnp.bfloat16)
    bo = params["out_proj_b"]
    wc = params["cls_w"].astype(jnp.bfloat16)
    bc = params["cls_b"]

    xb = x.astype(jnp.bfloat16)
    # softmax over a length-1 key axis == 1  =>  attention output == V
    v = jnp.dot(xb, wv.T, preferred_element_type=jnp.float32) + bv
    attn_out = jnp.dot(v.astype(jnp.bfloat16), wo.T,
                       preferred_element_type=jnp.float32) + bo
    logits = jnp.dot(attn_out.astype(jnp.bfloat16), wc.T,
                     preferred_element_type=jnp.float32) + bc
    return logits


if __name__ == "__main__":
    key = jax.random.PRNGKey(0)
    k_text, k_img, k_params = jax.random.split(key, 3)

    text_hidden = jax.random.normal(k_text, (B, S_TEXT, D_TEXT), jnp.float32)
    image_hidden = jax.random.normal(k_img, (B, D_IMG, 7, 7), jnp.float32)
    params = init_params(k_params)

    logits = attention_forward(text_hidden, image_hidden, params)
    logits = jax.block_until_ready(logits)

    ref = reference_forward(text_hidden, image_hidden, params)
    assert logits.shape == (B, NUM_LABELS)
    # bf16 weights + split f32 accumulation order -> modest tolerance
    assert jnp.allclose(logits, ref, rtol=1e-2, atol=1e-2), "mismatch vs reference"

    print("KERNEL_OK")
</pallas_src>

<mosaic_0001>
module attributes {stable_mosaic.version = 11 : i64} {
  func.func @_attention_kernel(%arg0: i32, %arg1: memref<8x128xf32, #tpu.memory_space<vmem>>, %arg2: memref<8x49x128xf32, #tpu.memory_space<vmem>>, %arg3: memref<256x128xbf16, #tpu.memory_space<vmem>>, %arg4: memref<1x128xf32, #tpu.memory_space<vmem>>, %arg5: memref<128x256xbf16, #tpu.memory_space<vmem>>, %arg6: memref<1x256xf32, #tpu.memory_space<vmem>>, %arg7: memref<256x128xbf16, #tpu.memory_space<vmem>>, %arg8: memref<1x128xf32, #tpu.memory_space<vmem>>, %arg9: memref<8x128xf32, #tpu.memory_space<vmem>>, %arg10: memref<8x256xbf16, #tpu.memory_space<vmem>>, %arg11: memref<8x256xf32, #tpu.memory_space<vmem>>) attributes {dimension_semantics = [#tpu.dimension_semantics<arbitrary>], iteration_bounds = array<i64: 2>, scalar_prefetch = 0 : i64, scratch_operands = 2 : i64, tpu.core_type = #tpu.core_type<tc>, window_params = [{pipeline_mode = #tpu.pipeline_mode<synchronous>, transform_indices = @transform_0, window_bounds = array<i64: 8, 128>}, {pipeline_mode = #tpu.pipeline_mode<synchronous>, transform_indices = @transform_1, window_bounds = array<i64: 8, 49, 128>}, {transform_indices = @transform_2, window_bounds = array<i64: 256, 128>}, {transform_indices = @transform_3, window_bounds = array<i64: 1, 128>}, {transform_indices = @transform_4, window_bounds = array<i64: 128, 256>}, {pipeline_mode = #tpu.pipeline_mode<synchronous>, transform_indices = @transform_5, window_bounds = array<i64: 1, 256>}, {pipeline_mode = #tpu.pipeline_mode<synchronous>, transform_indices = @transform_6, window_bounds = array<i64: 256, 128>}, {pipeline_mode = #tpu.pipeline_mode<synchronous>, transform_indices = @transform_7, window_bounds = array<i64: 1, 128>}, {pipeline_mode = #tpu.pipeline_mode<synchronous>, transform_indices = @transform_8, window_bounds = array<i64: 8, 128>}]} {
    %c0_i32 = arith.constant 0 : i32
    %0 = arith.cmpi eq, %arg0, %c0_i32 : i32
    %1 = arith.extui %0 : i1 to i32
    %c0_i32_0 = arith.constant 0 : i32
    %2 = arith.cmpi ne, %1, %c0_i32_0 : i32
    scf.if %2 {
      %c0_14 = arith.constant 0 : index
      %c0_15 = arith.constant 0 : index
      %c0_16 = arith.constant 0 : index
      %18 = vector.load %arg2[%c0_14, %c0_15, %c0_16] : memref<8x49x128xf32, #tpu.memory_space<vmem>>, vector<8x49x128xf32>
      %cst_17 = arith.constant dense<0xFF800000> : vector<8x128xf32>
      %19 = vector.multi_reduction <maximumf>, %18, %cst_17 [1] : vector<8x49x128xf32> to vector<8x128xf32>
      %c0_18 = arith.constant 0 : index
      %c0_19 = arith.constant 0 : index
      %20 = vector.load %arg1[%c0_18, %c0_19] : memref<8x128xf32, #tpu.memory_space<vmem>>, vector<8x128xf32>
      %21 = tpu.concatenate %20, %19 in 1 : vector<8x128xf32>, vector<8x128xf32> -> vector<8x256xf32>
      %22 = arith.truncf %21 : vector<8x256xf32> to vector<8x256xbf16>
      %c0_20 = arith.constant 0 : index
      %c0_21 = arith.constant 0 : index
      %23 = vector.load %arg10[%c0_20, %c0_21] : memref<8x256xbf16, #tpu.memory_space<vmem>>, vector<8x256xbf16>
      tpu.vector_store %arg10[%c0_20, %c0_21], %22 {strides = array<i32>} : memref<8x256xbf16, #tpu.memory_space<vmem>>, vector<8x256xbf16>,
      %cst_22 = arith.constant 0.000000e+00 : f32
      %24 = vector.broadcast %cst_22 : f32 to vector<8x256xf32>
      %c0_23 = arith.constant 0 : index
      %c0_24 = arith.constant 0 : index
      %25 = vector.load %arg11[%c0_23, %c0_24] : memref<8x256xf32, #tpu.memory_space<vmem>>, vector<8x256xf32>
      tpu.vector_store %arg11[%c0_23, %c0_24], %24 {strides = array<i32>} : memref<8x256xf32, #tpu.memory_space<vmem>>, vector<8x256xf32>,
    } else {
    }
    %c0 = arith.constant 0 : index
    %c0_1 = arith.constant 0 : index
    %3 = vector.load %arg10[%c0, %c0_1] : memref<8x256xbf16, #tpu.memory_space<vmem>>, vector<8x256xbf16>
    %c0_2 = arith.constant 0 : index
    %c0_3 = arith.constant 0 : index
    %4 = vector.load %arg3[%c0_2, %c0_3] : memref<256x128xbf16, #tpu.memory_space<vmem>>, vector<256x128xbf16>
    %cst = arith.constant dense<0.000000e+00> : vector<8x128xf32>
    %5 = tpu.matmul %3, %4, %cst {dimension_numbers = #tpu.dot_dimension_numbers<[1], [0], [0], [1], [0, 0, 1, 1], [], []>} : vector<8x256xbf16>, vector<256x128xbf16>, vector<8x128xf32> -> vector<8x128xf32>
    %c0_4 = arith.constant 0 : index
    %c0_5 = arith.constant 0 : index
    %6 = vector.load %arg4[%c0_4, %c0_5] : memref<1x128xf32, #tpu.memory_space<vmem>>, vector<1x128xf32>
    %7 = vector.broadcast %6 : vector<1x128xf32> to vector<8x128xf32>
    %8 = arith.addf %5, %7 : vector<8x128xf32>
    %c0_6 = arith.constant 0 : index
    %c0_7 = arith.constant 0 : index
    %9 = vector.load %arg11[%c0_6, %c0_7] : memref<8x256xf32, #tpu.memory_space<vmem>>, vector<8x256xf32>
    %10 = arith.truncf %8 : vector<8x128xf32> to vector<8x128xbf16>
    %c0_8 = arith.constant 0 : index
    %c0_9 = arith.constant 0 : index
    %11 = vector.load %arg5[%c0_8, %c0_9] : memref<128x256xbf16, #tpu.memory_space<vmem>>, vector<128x256xbf16>
    %cst_10 = arith.constant dense<0.000000e+00> : vector<8x256xf32>
    %12 = tpu.matmul %10, %11, %cst_10 {dimension_numbers = #tpu.dot_dimension_numbers<[1], [0], [0], [1], [0, 0, 1, 1], [], []>} : vector<8x128xbf16>, vector<128x256xbf16>, vector<8x256xf32> -> vector<8x256xf32>
    %13 = arith.addf %9, %12 : vector<8x256xf32>
    %c0_11 = arith.constant 0 : index
    %c0_12 = arith.constant 0 : index
    %14 = vector.load %arg11[%c0_11, %c0_12] : memref<8x256xf32, #tpu.memory_space<vmem>>, vector<8x256xf32>
    tpu.vector_store %arg11[%c0_11, %c0_12], %13 {strides = array<i32>} : memref<8x256xf32, #tpu.memory_space<vmem>>, vector<8x256xf32>,
    %c1_i32 = arith.constant 1 : i32
    %15 = arith.cmpi eq, %arg0, %c1_i32 : i32
    %16 = arith.extui %15 : i1 to i32
    %c0_i32_13 = arith.constant 0 : i32
    %17 = arith.cmpi ne, %16, %c0_i32_13 : i32
    scf.if %17 {
      %c0_14 = arith.constant 0 : index
      %c0_15 = arith.constant 0 : index
      %18 = vector.load %arg11[%c0_14, %c0_15] : memref<8x256xf32, #tpu.memory_space<vmem>>, vector<8x256xf32>
      %c0_16 = arith.constant 0 : index
      %c0_17 = arith.constant 0 : index
      %19 = vector.load %arg6[%c0_16, %c0_17] : memref<1x256xf32, #tpu.memory_space<vmem>>, vector<1x256xf32>
      %20 = vector.broadcast %19 : vector<1x256xf32> to vector<8x256xf32>
      %21 = arith.addf %18, %20 : vector<8x256xf32>
      %22 = arith.truncf %21 : vector<8x256xf32> to vector<8x256xbf16>
      %c0_18 = arith.constant 0 : index
      %c0_19 = arith.constant 0 : index
      %23 = vector.load %arg7[%c0_18, %c0_19] : memref<256x128xbf16, #tpu.memory_space<vmem>>, vector<256x128xbf16>
      %cst_20 = arith.constant dense<0.000000e+00> : vector<8x128xf32>
      %24 = tpu.matmul %22, %23, %cst_20 {dimension_numbers = #tpu.dot_dimension_numbers<[1], [0], [0], [1], [0, 0, 1, 1], [], []>} : vector<8x256xbf16>, vector<256x128xbf16>, vector<8x128xf32> -> vector<8x128xf32>
      %c0_21 = arith.constant 0 : index
      %c0_22 = arith.constant 0 : index
      %25 = vector.load %arg8[%c0_21, %c0_22] : memref<1x128xf32, #tpu.memory_space<vmem>>, vector<1x128xf32>
      %26 = vector.broadcast %25 : vector<1x128xf32> to vector<8x128xf32>
      %27 = arith.addf %24, %26 : vector<8x128xf32>
      %c0_23 = arith.constant 0 : index
      %c0_24 = arith.constant 0 : index
      %28 = vector.load %arg9[%c0_23, %c0_24] : memref<8x128xf32, #tpu.memory_space<vmem>>, vector<8x128xf32>
      tpu.vector_store %arg9[%c0_23, %c0_24], %27 {strides = array<i32>} : memref<8x128xf32, #tpu.memory_space<vmem>>, vector<8x128xf32>,
    } else {
    }
    return
  }
  func.func @transform_0(%arg0: i32) -> (i32, i32) {
    %c0_i32 = arith.constant 0 : i32
    %c0_i32_0 = arith.constant 0 : i32
    %c0_i32_1 = arith.constant 0 : i32
    return %c0_i32, %c0_i32_0 : i32, i32
  }
  func.func @transform_1(%arg0: i32) -> (i32, i32, i32) {
    %c0_i32 = arith.constant 0 : i32
    %c0_i32_0 = arith.constant 0 : i32
    %c0_i32_1 = arith.constant 0 : i32
    %c0_i32_2 = arith.constant 0 : i32
    return %c0_i32, %c0_i32_0, %c0_i32_1 : i32, i32, i32
  }
  func.func @transform_2(%arg0: i32) -> (i32, i32) {
    %c0_i32 = arith.constant 0 : i32
    %c0_i32_0 = arith.constant 0 : i32
    return %c0_i32, %arg0 : i32, i32
  }
  func.func @transform_3(%arg0: i32) -> (i32, i32) {
    %c0_i32 = arith.constant 0 : i32
    %c0_i32_0 = arith.constant 0 : i32
    return %c0_i32, %arg0 : i32, i32
  }
  func.func @transform_4(%arg0: i32) -> (i32, i32) {
    %c0_i32 = arith.constant 0 : i32
    %c0_i32_0 = arith.constant 0 : i32
    return %arg0, %c0_i32 : i32, i32
  }
  func.func @transform_5(%arg0: i32) -> (i32, i32) {
    %c0_i32 = arith.constant 0 : i32
    %c0_i32_0 = arith.constant 0 : i32
    %c0_i32_1 = arith.constant 0 : i32
    return %c0_i32, %c0_i32_0 : i32, i32
  }
  func.func @transform_6(%arg0: i32) -> (i32, i32) {
    %c0_i32 = arith.constant 0 : i32
    %c0_i32_0 = arith.constant 0 : i32
    %c0_i32_1 = arith.constant 0 : i32
    return %c0_i32, %c0_i32_0 : i32, i32
  }
  func.func @transform_7(%arg0: i32) -> (i32, i32) {
    %c0_i32 = arith.constant 0 : i32
    %c0_i32_0 = arith.constant 0 : i32
    %c0_i32_1 = arith.constant 0 : i32
    return %c0_i32, %c0_i32_0 : i32, i32
  }
  func.func @transform_8(%arg0: i32) -> (i32, i32) {
    %c0_i32 = arith.constant 0 : i32
    %c0_i32_0 = arith.constant 0 : i32
    %c0_i32_1 = arith.constant 0 : i32
    return %c0_i32, %c0_i32_0 : i32, i32
  }
}

</mosaic_0001>

<llo_original>
// kernel: tpu_custom_call.1
$region0: #{tpu_custom_call.1}
  #allocation0 [shape = 'u32[]', space=smem, size = 0x4, offset = 0x4, fixed_abs, tag = 'smem constant byte address 0x4 - core index']
  #allocation1 [shape = 'u32[144,128]{1,0:T(1,128)}', space=vmem, size = 0x12000, scoped, tag = 'internal scratch']
  #allocation2 [shape = 'bf16[8,256]{1,0:T(8,128)(2,1)}', space=vmem, size = 0x1000, scoped, tag = 'scratch operand']
  #allocation3 [shape = 'f32[8,256]{1,0:T(8,128)}', space=vmem, size = 0x2000, scoped, tag = 'scratch operand']
  %s0 = inlined_call_operand.vmem [shape: f32[8,128], index: 0, kind: input, shape index: {}]
  %s1 = inlined_call_operand.vmem [shape: f32[8,49,128], index: 1, kind: input, shape index: {}]
  %s2 = inlined_call_operand.vmem [shape: bf16[256,256], index: 2, kind: input, shape index: {}]
  %s3 = inlined_call_operand.vmem [shape: f32[1,256], index: 3, kind: input, shape index: {}]
  %s4 = inlined_call_operand.vmem [shape: bf16[256,256], index: 4, kind: input, shape index: {}]
  %s5 = inlined_call_operand.vmem [shape: f32[1,256], index: 5, kind: input, shape index: {}]
  %s6 = inlined_call_operand.vmem [shape: bf16[256,128], index: 6, kind: input, shape index: {}]
  %s7 = inlined_call_operand.vmem [shape: f32[1,128], index: 7, kind: input, shape index: {}]
  %s8 = inlined_call_operand.hbm [shape: f32[8,128], index: 8, kind: output, shape index: {}]
  %s9 = sld [smem:[#allocation0]]
  $region114: #{tpu_custom_call.1} parent=0
    _
  %s11 = ssub.s32 1, %s9
  %s12 = scalar_select 0, %s11, %s9
  $region1: #{tpu_custom_call.1} parent=0
    #allocation4 [shape = 'u8[131072]{0}', space=vmem, size = 0x20000, scoped, tag = 'input window, operand 2']
    #allocation5 [shape = 'u8[4096]{0}', space=vmem, size = 0x1000, scoped, tag = 'output window, operand 0, single buffered']
    #allocation6 [shape = 's32[2]{0}', space=sflag, size = 0x8, scoped, tag = 'scoped memory for tpu_custom_call.1']
    %13 = vsyncpa [#allocation6], 0
    loop: start=0, step=1, limit=4
    $region2: #{tpu_custom_call.1} parent=1 // loop_pre_header
      _
    $region3: #{tpu_custom_call.1} parent=1 // loop_header
      %s15 = sphi 0, %s19
      %p16 = scmp.ge.s32.totalorder %s15, 4
      %s23 = sphi 0, %s23
      %s25 = sphi 0, %s23
      %s26 = sphi 0, %s25
      %s40 = sphi 0, %s26
      %s44 = sphi 0, %s44
      %s46 = sphi 0, %s44
      %s47 = sphi 0, %s46
      %s61 = sphi 0, %s47
      %s67 = sphi 0, %s69
      %s70 = sphi 0, %s67
      %s71 = sphi 0, %s70
      %s87 = sphi 0, %s71
      %s93 = sphi 0, %s95
      %s96 = sphi 0, %s93
      %s97 = sphi 0, %s96
      %s113 = sphi 0, %s97
      %s119 = sphi 0, %s121
      %s122 = sphi 0, %s119
      %s123 = sphi 0, %s122
      %s139 = sphi 0, %s123
      %s143 = sphi 0, %s143
      %s145 = sphi 0, %s143
      %s146 = sphi 0, %s145
      %s160 = sphi 0, %s146
      %s164 = sphi 0, %s164
      %s166 = sphi 0, %s164
      %s167 = sphi 0, %s166
      %s181 = sphi 0, %s167
      %s185 = sphi 0, %s185
      %s187 = sphi 0, %s185
      %s188 = sphi 0, %s187
      %s202 = sphi 0, %s188
      %s206 = sphi 0, %s206
      %s208 = sphi 0, %s206
      %s209 = sphi 0, %s208
      %s223 = sphi 0, %s209
    $region4: #{tpu_custom_call.1} parent=1 // loop_header_branch
      %18 = sbr.rel (%p16) target = $region8
    $region5: #{tpu_custom_call.1} parent=1 // loop_body
      %s20 = ssub.s32 %s15, 1
      %s21 = ssub.s32 %s15, 2
      %s22 = sadd.s32 %s15, 1
      %s24 = sadd.s32 %s23, 1
      %p27 = scmp.eq.s32.totalorder %s15, 1
      %p28 = scmp.ne.s32.totalorder %s23, %s25
      %p29 = scmp.eq.s32.totalorder %s15, 0
      %p30 = por %p28, %p29
      %p31 = scmp.ne.s32.totalorder %s23, %s25
      %p32 = scmp.eq.s32.totalorder %s20, 1
      %p33 = por %p31, %p32
      %p34 = scmp.ne.s32.totalorder %s25, %s26
      %p35 = scmp.eq.s32.totalorder %s20, 0
      %p36 = por %p34, %p35
      %p37 = scmp.ne.s32.totalorder %s25, %s26
      %p38 = scmp.eq.s32.totalorder %s21, 1
      %p39 = por %p37, %p38
      %p41 = scmp.ne.s32.totalorder %s26, %s40
      %p42 = scmp.eq.s32.totalorder %s21, 0
      %p43 = por %p41, %p42
      %s45 = sadd.s32 %s44, 1
      %p48 = scmp.eq.s32.totalorder %s15, 1
      %p49 = scmp.ne.s32.totalorder %s44, %s46
      %p50 = scmp.eq.s32.totalorder %s15, 0
      %p51 = por %p49, %p50
      %p52 = scmp.ne.s32.totalorder %s44, %s46
      %p53 = scmp.eq.s32.totalorder %s20, 1
      %p54 = por %p52, %p53
      %p55 = scmp.ne.s32.totalorder %s46, %s47
      %p56 = scmp.eq.s32.totalorder %s20, 0
      %p57 = por %p55, %p56
      %p58 = scmp.ne.s32.totalorder %s46, %s47
      %p59 = scmp.eq.s32.totalorder %s21, 1
      %p60 = por %p58, %p59
      %p62 = scmp.ne.s32.totalorder %s47, %s61
      %p63 = scmp.eq.s32.totalorder %s21, 0
      %p64 = por %p62, %p63
      %s65 = ssub.s32 %s15, %s22
      %p66 = scmp.eq.s32.totalorder %s65, 0
      %s68 = sadd.s32 %s67, 1
      %s69 = scalar_select %p66, %s67, %s68
      %p72 = pneg %p66
      %p73 = scmp.eq.s32.totalorder %s15, 1
      %p74 = por %p72, %p73
      %p75 = scmp.ne.s32.totalorder %s67, %s70
      %p76 = scmp.eq.s32.totalorder %s15, 0
      %p77 = por %p75, %p76
      %p78 = scmp.ne.s32.totalorder %s67, %s70
      %p79 = scmp.eq.s32.totalorder %s20, 1
      %p80 = por %p78, %p79
      %p81 = scmp.ne.s32.totalorder %s70, %s71
      %p82 = scmp.eq.s32.totalorder %s20, 0
      %p83 = por %p81, %p82
      %p84 = scmp.ne.s32.totalorder %s70, %s71
      %p85 = scmp.eq.s32.totalorder %s21, 1
      %p86 = por %p84, %p85
      %p88 = scmp.ne.s32.totalorder %s71, %s87
      %p89 = scmp.eq.s32.totalorder %s21, 0
      %p90 = por %p88, %p89
      %s91 = ssub.s32 %s15, %s22
      %p92 = scmp.eq.s32.totalorder %s91, 0
      %s94 = sadd.s32 %s93, 1
      %s95 = scalar_select %p92, %s93, %s94
      %p98 = pneg %p92
      %p99 = scmp.eq.s32.totalorder %s15, 1
      %p100 = por %p98, %p99
      %p101 = scmp.ne.s32.totalorder %s93, %s96
      %p102 = scmp.eq.s32.totalorder %s15, 0
      %p103 = por %p101, %p102
      %p104 = scmp.ne.s32.totalorder %s93, %s96
      %p105 = scmp.eq.s32.totalorder %s20, 1
      %p106 = por %p104, %p105
      %p107 = scmp.ne.s32.totalorder %s96, %s97
      %p108 = scmp.eq.s32.totalorder %s20, 0
      %p109 = por %p107, %p108
      %p110 = scmp.ne.s32.totalorder %s96, %s97
      %p111 = scmp.eq.s32.totalorder %s21, 1
      %p112 = por %p110, %p111
      %p114 = scmp.ne.s32.totalorder %s97, %s113
      %p115 = scmp.eq.s32.totalorder %s21, 0
      %p116 = por %p114, %p115
      %s117 = ssub.s32 %s15, %s22
      %p118 = scmp.eq.s32.totalorder %s117, 0
      %s120 = sadd.s32 %s119, 1
      %s121 = scalar_select %p118, %s119, %s120
      %p124 = pneg %p118
      %p125 = scmp.eq.s32.totalorder %s15, 1
      %p126 = por %p124, %p125
      %p127 = scmp.ne.s32.totalorder %s119, %s122
      %p128 = scmp.eq.s32.totalorder %s15, 0
      %p129 = por %p127, %p128
      %p130 = scmp.ne.s32.totalorder %s119, %s122
      %p131 = scmp.eq.s32.totalorder %s20, 1
      %p132 = por %p130, %p131
      %p133 = scmp.ne.s32.totalorder %s122, %s123
      %p134 = scmp.eq.s32.totalorder %s20, 0
      %p135 = por %p133, %p134
      %p136 = scmp.ne.s32.totalorder %s122, %s123
      %p137 = scmp.eq.s32.totalorder %s21, 1
      %p138 = por %p136, %p137
      %p140 = scmp.ne.s32.totalorder %s123, %s139
      %p141 = scmp.eq.s32.totalorder %s21, 0
      %p142 = por %p140, %p141
      %s144 = sadd.s32 %s143, 1
      %p147 = scmp.eq.s32.totalorder %s15, 1
      %p148 = scmp.ne.s32.totalorder %s143, %s145
      %p149 = scmp.eq.s32.totalorder %s15, 0
      %p150 = por %p148, %p149
      %p151 = scmp.ne.s32.totalorder %s143, %s145
      %p152 = scmp.eq.s32.totalorder %s20, 1
      %p153 = por %p151, %p152
      %p154 = scmp.ne.s32.totalorder %s145, %s146
      %p155 = scmp.eq.s32.totalorder %s20, 0
      %p156 = por %p154, %p155
      %p157 = scmp.ne.s32.totalorder %s145, %s146
      %p158 = scmp.eq.s32.totalorder %s21, 1
      %p159 = por %p157, %p158
      %p161 = scmp.ne.s32.totalorder %s146, %s160
      %p162 = scmp.eq.s32.totalorder %s21, 0
      %p163 = por %p161, %p162
      %s165 = sadd.s32 %s164, 1
      %p168 = scmp.eq.s32.totalorder %s15, 1
      %p169 = scmp.ne.s32.totalorder %s164, %s166
      %p170 = scmp.eq.s32.totalorder %s15, 0
      %p171 = por %p169, %p170
      %p172 = scmp.ne.s32.totalorder %s164, %s166
      %p173 = scmp.eq.s32.totalorder %s20, 1
      %p174 = por %p172, %p173
      %p175 = scmp.ne.s32.totalorder %s166, %s167
      %p176 = scmp.eq.s32.totalorder %s20, 0
      %p177 = por %p175, %p176
      %p178 = scmp.ne.s32.totalorder %s166, %s167
      %p179 = scmp.eq.s32.totalorder %s21, 1
      %p180 = por %p178, %p179
      %p182 = scmp.ne.s32.totalorder %s167, %s181
      %p183 = scmp.eq.s32.totalorder %s21, 0
      %p184 = por %p182, %p183
      %s186 = sadd.s32 %s185, 1
      %p189 = scmp.eq.s32.totalorder %s15, 1
      %p190 = scmp.ne.s32.totalorder %s185, %s187
      %p191 = scmp.eq.s32.totalorder %s15, 0
      %p192 = por %p190, %p191
      %p193 = scmp.ne.s32.totalorder %s185, %s187
      %p194 = scmp.eq.s32.totalorder %s20, 1
      %p195 = por %p193, %p194
      %p196 = scmp.ne.s32.totalorder %s187, %s188
      %p197 = scmp.eq.s32.totalorder %s20, 0
      %p198 = por %p196, %p197
      %p199 = scmp.ne.s32.totalorder %s187, %s188
      %p200 = scmp.eq.s32.totalorder %s21, 1
      %p201 = por %p199, %p200
      %p203 = scmp.ne.s32.totalorder %s188, %s202
      %p204 = scmp.eq.s32.totalorder %s21, 0
      %p205 = por %p203, %p204
      %s207 = sadd.s32 %s206, 1
      %p210 = scmp.eq.s32.totalorder %s15, 1
      %p211 = scmp.ne.s32.totalorder %s206, %s208
      %p212 = scmp.eq.s32.totalorder %s15, 0
      %p213 = por %p211, %p212
      %p214 = scmp.ne.s32.totalorder %s206, %s208
      %p215 = scmp.eq.s32.totalorder %s20, 1
      %p216 = por %p214, %p215
      %p217 = scmp.ne.s32.totalorder %s208, %s209
      %p218 = scmp.eq.s32.totalorder %s20, 0
      %p219 = por %p217, %p218
      %p220 = scmp.ne.s32.totalorder %s208, %s209
      %p221 = scmp.eq.s32.totalorder %s21, 1
      %p222 = por %p220, %p221
      %p224 = scmp.ne.s32.totalorder %s209, %s223
      %p225 = scmp.eq.s32.totalorder %s21, 0
      %p226 = por %p224, %p225
      %p227 = scmp.le.s32.totalorder 1, %s15
      %p228 = scmp.lt.s32.totalorder %s15, 3
      %p229 = pnand %p227, %p228
      %p230 = pneg %p229
      // Predicated region
      $region9: #{tpu_custom_call.1} parent=5 // pred_check
        _
      $region10: #{tpu_custom_call.1} parent=5 // pred_check_branch
        %232 = sbr.rel (%p229) target = $region12
      $region11: #{tpu_custom_call.1} parent=5 // pred_region
        %s233 = ssub.s32 %s15, 1
        // Predicated region
        $region13: #{tpu_custom_call.1} parent=11 // pred_check
          %p234 = pneg %p36
        $region14: #{tpu_custom_call.1} parent=11 // pred_check_branch
          %236 = sbr.rel (%p234) target = $region16
        $region15: #{tpu_custom_call.1} parent=11 // pred_region
          _
        $region16: #{tpu_custom_call.1} parent=11 // pred_fallthru
          _
        // Predicated region
        $region17: #{tpu_custom_call.1} parent=11 // pred_check
          %p237 = pneg %p57
        $region18: #{tpu_custom_call.1} parent=11 // pred_check_branch
          %239 = sbr.rel (%p237) target = $region20
        $region19: #{tpu_custom_call.1} parent=11 // pred_region
          _
        $region20: #{tpu_custom_call.1} parent=11 // pred_fallthru
          _
        // Predicated region
        $region21: #{tpu_custom_call.1} parent=11 // pred_check
          %p240 = pneg %p156
        $region22: #{tpu_custom_call.1} parent=11 // pred_check_branch
          %242 = sbr.rel (%p240) target = $region24
        $region23: #{tpu_custom_call.1} parent=11 // pred_region
          _
        $region24: #{tpu_custom_call.1} parent=11 // pred_fallthru
          _
        // Predicated region
        $region25: #{tpu_custom_call.1} parent=11 // pred_check
          %p243 = pneg %p177
        $region26: #{tpu_custom_call.1} parent=11 // pred_check_branch
          %245 = sbr.rel (%p243) target = $region28
        $region27: #{tpu_custom_call.1} parent=11 // pred_region
          _
        $region28: #{tpu_custom_call.1} parent=11 // pred_fallthru
          _
        // Predicated region
        $region29: #{tpu_custom_call.1} parent=11 // pred_check
          %p246 = pneg %p198
        $region30: #{tpu_custom_call.1} parent=11 // pred_check_branch
          %248 = sbr.rel (%p246) target = $region32
        $region31: #{tpu_custom_call.1} parent=11 // pred_region
          _
        $region32: #{tpu_custom_call.1} parent=11 // pred_fallthru
          _
      $region12: #{tpu_custom_call.1} parent=5 // pred_fallthru
        _
      %p249 = scmp.lt.s32.totalorder %s15, 2
      // Predicated region
      $region33: #{tpu_custom_call.1} parent=5 // pred_check
        %p250 = pneg %p249
      $region34: #{tpu_custom_call.1} parent=5 // pred_check_branch
        %252 = sbr.rel (%p250) target = $region36
      $region35: #{tpu_custom_call.1} parent=5 // pred_region
        // Predicated region
        $region37: #{tpu_custom_call.1} parent=35 // pred_check
          %p253 = pneg %p77
        $region38: #{tpu_custom_call.1} parent=35 // pred_check_branch
          %255 = sbr.rel (%p253) target = $region40
        $region39: #{tpu_custom_call.1} parent=35 // pred_region
          %s256 = sand.u32 %s67, 1
          %s257 = sand.u32 %s67, 1
          %s258 = smul.addr %s257, 128
          %s259 = scalar_lea.vmem [#allocation4], %s258
          %s260 = smul.addr %s15, 4
          %s261 = scalar_lea.vmem %s2, %s260
          // Predicated region
          $region41: #{tpu_custom_call.1} parent=39 // pred_check
            _
          $region42: #{tpu_custom_call.1} parent=39 // pred_check_branch
            %263 = sbr.rel (0) target = $region44
          $region43: #{tpu_custom_call.1} parent=39 // pred_region
            // Predicated region
            $region45: #{tpu_custom_call.1} parent=43 // pred_check
              _
            $region46: #{tpu_custom_call.1} parent=43 // pred_check_branch
              %265 = sbr.rel target = $region48
            $region47: #{tpu_custom_call.1} parent=43 // pred_region
              // Predicated region
              $region60: #{tpu_custom_call.1} parent=47 // pred_check
                _
              $region61: #{tpu_custom_call.1} parent=47 // pred_check_branch
                %343 = sbr.rel (0) target = $region63
              $region62: #{tpu_custom_call.1} parent=47 // pred_region
                loop: start=0, step=1, limit=1
                $region64: #{tpu_custom_call.1} parent=62 // loop_pre_header
                  _
                $region65: #{tpu_custom_call.1} parent=62 // loop_header
                  %s345 = sphi 0, %s349
                  %p346 = scmp.ge.s32.totalorder %s345, 1
                  %s350 = sphi %s261, %s261
                  %s351 = sphi %s259, %s259
                $region66: #{tpu_custom_call.1} parent=62 // loop_header_branch
                  %348 = sbr.rel (%p346) target = $region70
                $region67: #{tpu_custom_call.1} parent=62 // loop_body
                  _
                $region68: #{tpu_custom_call.1} parent=62 // loop_footer
                  %s349 = sadd.s32 1, %s345
                $region69: #{tpu_custom_call.1} parent=62 // loop_footer_branch
                  %344 = sbr.rel target = $region65
                $region70: #{tpu_custom_call.1} parent=62 // loop_exit
                  _
                %s353 = ssub.s32 16, 1
                loop: start=0, step=1, limit=1
                $region71: #{tpu_custom_call.1} parent=62 // loop_pre_header
                  _
                $region72: #{tpu_custom_call.1} parent=62 // loop_header
                  %s355 = sphi 0, %s359
                  %p356 = scmp.ge.s32.totalorder %s355, 1
                  %s360 = sphi %s261, %s261
                  %s361 = sphi %s259, %s259
                $region73: #{tpu_custom_call.1} parent=62 // loop_header_branch
                  %358 = sbr.rel (%p356) target = $region77
                $region74: #{tpu_custom_call.1} parent=62 // loop_body
                  %v362 = vld [vmem:[%s360] sm:%s353]
                  %363 = vst [vmem:[%s361] sm:%s353] %v362
                  %v364 = vld [vmem:[%s360 + $0x8] sm:%s353]
                  %365 = vst [vmem:[%s361 + $0x4] sm:%s353] %v364
                  %v366 = vld [vmem:[%s360 + $0x10] sm:%s353]
                  %367 = vst [vmem:[%s361 + $0x8] sm:%s353] %v366
                  %v368 = vld [vmem:[%s360 + $0x18] sm:%s353]
                  %369 = vst [vmem:[%s361 + $0xc] sm:%s353] %v368
                  %v370 = vld [vmem:[%s360 + $0x20] sm:%s353]
                  %371 = vst [vmem:[%s361 + $0x10] sm:%s353] %v370
                  %v372 = vld [vmem:[%s360 + $0x28] sm:%s353]
                  %373 = vst [vmem:[%s361 + $0x14] sm:%s353] %v372
                  %v374 = vld [vmem:[%s360 + $0x30] sm:%s353]
                  %375 = vst [vmem:[%s361 + $0x18] sm:%s353] %v374
                  %v376 = vld [vmem:[%s360 + $0x38] sm:%s353]
                  %377 = vst [vmem:[%s361 + $0x1c] sm:%s353] %v376
                  %v378 = vld [vmem:[%s360 + $0x40] sm:%s353]
                  %379 = vst [vmem:[%s361 + $0x20] sm:%s353] %v378
                  %v380 = vld [vmem:[%s360 + $0x48] sm:%s353]
                  %381 = vst [vmem:[%s361 + $0x24] sm:%s353] %v380
                  %v382 = vld [vmem:[%s360 + $0x50] sm:%s353]
                  %383 = vst [vmem:[%s361 + $0x28] sm:%s353] %v382
                  %v384 = vld [vmem:[%s360 + $0x58] sm:%s353]
                  %385 = vst [vmem:[%s361 + $0x2c] sm:%s353] %v384
                  %v386 = vld [vmem:[%s360 + $0x60] sm:%s353]
                  %387 = vst [vmem:[%s361 + $0x30] sm:%s353] %v386
                  %v388 = vld [vmem:[%s360 + $0x68] sm:%s353]
                  %389 = vst [vmem:[%s361 + $0x34] sm:%s353] %v388
                  %v390 = vld [vmem:[%s360 + $0x70] sm:%s353]
                  %391 = vst [vmem:[%s361 + $0x38] sm:%s353] %v390
                  %v392 = vld [vmem:[%s360 + $0x78] sm:%s353]
                  %393 = vst [vmem:[%s361 + $0x3c] sm:%s353] %v392
                  %v394 = vld [vmem:[%s360 + $0x80] sm:%s353]
                  %395 = vst [vmem:[%s361 + $0x40] sm:%s353] %v394
                  %v396 = vld [vmem:[%s360 + $0x88] sm:%s353]
                  %397 = vst [vmem:[%s361 + $0x44] sm:%s353] %v396
                  %v398 = vld [vmem:[%s360 + $0x90] sm:%s353]
                  %399 = vst [vmem:[%s361 + $0x48] sm:%s353] %v398
                  %v400 = vld [vmem:[%s360 + $0x98] sm:%s353]
                  %401 = vst [vmem:[%s361 + $0x4c] sm:%s353] %v400
                  %v402 = vld [vmem:[%s360 + $0xa0] sm:%s353]
                  %403 = vst [vmem:[%s361 + $0x50] sm:%s353] %v402
                  %v404 = vld [vmem:[%s360 + $0xa8] sm:%s353]
                  %405 = vst [vmem:[%s361 + $0x54] sm:%s353] %v404
                  %v406 = vld [vmem:[%s360 + $0xb0] sm:%s353]
                  %407 = vst [vmem:[%s361 + $0x58] sm:%s353] %v406
                  %v408 = vld [vmem:[%s360 + $0xb8] sm:%s353]
                  %409 = vst [vmem:[%s361 + $0x5c] sm:%s353] %v408
                  %v410 = vld [vmem:[%s360 + $0xc0] sm:%s353]
                  %411 = vst [vmem:[%s361 + $0x60] sm:%s353] %v410
                  %v412 = vld [vmem:[%s360 + $0xc8] sm:%s353]
                  %413 = vst [vmem:[%s361 + $0x64] sm:%s353] %v412
                  %v414 = vld [vmem:[%s360 + $0xd0] sm:%s353]
                  %415 = vst [vmem:[%s361 + $0x68] sm:%s353] %v414
                  %v416 = vld [vmem:[%s360 + $0xd8] sm:%s353]
                  %417 = vst [vmem:[%s361 + $0x6c] sm:%s353] %v416
                  %v418 = vld [vmem:[%s360 + $0xe0] sm:%s353]
                  %419 = vst [vmem:[%s361 + $0x70] sm:%s353] %v418
                  %v420 = vld [vmem:[%s360 + $0xe8] sm:%s353]
                  %421 = vst [vmem:[%s361 + $0x74] sm:%s353] %v420
                  %v422 = vld [vmem:[%s360 + $0xf0] sm:%s353]
                  %423 = vst [vmem:[%s361 + $0x78] sm:%s353] %v422
                  %v424 = vld [vmem:[%s360 + $0xf8] sm:%s353]
                  %425 = vst [vmem:[%s361 + $0x7c] sm:%s353] %v424
                $region75: #{tpu_custom_call.1} parent=62 // loop_footer
                  %s359 = sadd.s32 1, %s355
                $region76: #{tpu_custom_call.1} parent=62 // loop_footer_branch
                  %354 = sbr.rel target = $region72
                $region77: #{tpu_custom_call.1} parent=62 // loop_exit
                  _
              $region63: #{tpu_custom_call.1} parent=47 // pred_fallthru
                _
            $region48: #{tpu_custom_call.1} parent=43 // pred_fallthru
              _
            // Predicated region
            $region49: #{tpu_custom_call.1} parent=43 // pred_check
              _
            $region50: #{tpu_custom_call.1} parent=43 // pred_check_branch
              %267 = sbr.rel (0) target = $region52
            $region51: #{tpu_custom_call.1} parent=43 // pred_region
              %s269 = ssub.s32 16, 1
              loop: start=0, step=1, limit=1
              $region53: #{tpu_custom_call.1} parent=51 // loop_pre_header
                _
              $region54: #{tpu_custom_call.1} parent=51 // loop_header
                %s271 = sphi 0, %s275
                %p272 = scmp.ge.s32.totalorder %s271, 1
                %s276 = sphi %s261, %s261
                %s277 = sphi %s259, %s259
              $region55: #{tpu_custom_call.1} parent=51 // loop_header_branch
                %274 = sbr.rel (%p272) target = $region59
              $region56: #{tpu_custom_call.1} parent=51 // loop_body
                %v278 = vld [vmem:[%s276] sm:%s269]
                %279 = vst [vmem:[%s277] sm:%s269] %v278
                %v280 = vld [vmem:[%s276 + $0x8] sm:%s269]
                %281 = vst [vmem:[%s277 + $0x4] sm:%s269] %v280
                %v282 = vld [vmem:[%s276 + $0x10] sm:%s269]
                %283 = vst [vmem:[%s277 + $0x8] sm:%s269] %v282
                %v284 = vld [vmem:[%s276 + $0x18] sm:%s269]
                %285 = vst [vmem:[%s277 + $0xc] sm:%s269] %v284
                %v286 = vld [vmem:[%s276 + $0x20] sm:%s269]
                %287 = vst [vmem:[%s277 + $0x10] sm:%s269] %v286
                %v288 = vld [vmem:[%s276 + $0x28] sm:%s269]
                %289 = vst [vmem:[%s277 + $0x14] sm:%s269] %v288
                %v290 = vld [vmem:[%s276 + $0x30] sm:%s269]
                %291 = vst [vmem:[%s277 + $0x18] sm:%s269] %v290
                %v292 = vld [vmem:[%s276 + $0x38] sm:%s269]
                %293 = vst [vmem:[%s277 + $0x1c] sm:%s269] %v292
                %v294 = vld [vmem:[%s276 + $0x40] sm:%s269]
                %295 = vst [vmem:[%s277 + $0x20] sm:%s269] %v294
                %v296 = vld [vmem:[%s276 + $0x48] sm:%s269]
                %297 = vst [vmem:[%s277 + $0x24] sm:%s269] %v296
                %v298 = vld [vmem:[%s276 + $0x50] sm:%s269]
                %299 = vst [vmem:[%s277 + $0x28] sm:%s269] %v298
                %v300 = vld [vmem:[%s276 + $0x58] sm:%s269]
                %301 = vst [vmem:[%s277 + $0x2c] sm:%s269] %v300
                %v302 = vld [vmem:[%s276 + $0x60] sm:%s269]
                %303 = vst [vmem:[%s277 + $0x30] sm:%s269] %v302
                %v304 = vld [vmem:[%s276 + $0x68] sm:%s269]
                %305 = vst [vmem:[%s277 + $0x34] sm:%s269] %v304
                %v306 = vld [vmem:[%s276 + $0x70] sm:%s269]
                %307 = vst [vmem:[%s277 + $0x38] sm:%s269] %v306
                %v308 = vld [vmem:[%s276 + $0x78] sm:%s269]
                %309 = vst [vmem:[%s277 + $0x3c] sm:%s269] %v308
                %v310 = vld [vmem:[%s276 + $0x80] sm:%s269]
                %311 = vst [vmem:[%s277 + $0x40] sm:%s269] %v310
                %v312 = vld [vmem:[%s276 + $0x88] sm:%s269]
                %313 = vst [vmem:[%s277 + $0x44] sm:%s269] %v312
                %v314 = vld [vmem:[%s276 + $0x90] sm:%s269]
                %315 = vst [vmem:[%s277 + $0x48] sm:%s269] %v314
                %v316 = vld [vmem:[%s276 + $0x98] sm:%s269]
                %317 = vst [vmem:[%s277 + $0x4c] sm:%s269] %v316
                %v318 = vld [vmem:[%s276 + $0xa0] sm:%s269]
                %319 = vst [vmem:[%s277 + $0x50] sm:%s269] %v318
                %v320 = vld [vmem:[%s276 + $0xa8] sm:%s269]
                %321 = vst [vmem:[%s277 + $0x54] sm:%s269] %v320
                %v322 = vld [vmem:[%s276 + $0xb0] sm:%s269]
                %323 = vst [vmem:[%s277 + $0x58] sm:%s269] %v322
                %v324 = vld [vmem:[%s276 + $0xb8] sm:%s269]
                %325 = vst [vmem:[%s277 + $0x5c] sm:%s269] %v324
                %v326 = vld [vmem:[%s276 + $0xc0] sm:%s269]
                %327 = vst [vmem:[%s277 + $0x60] sm:%s269] %v326
                %v328 = vld [vmem:[%s276 + $0xc8] sm:%s269]
                %329 = vst [vmem:[%s277 + $0x64] sm:%s269] %v328
                %v330 = vld [vmem:[%s276 + $0xd0] sm:%s269]
                %331 = vst [vmem:[%s277 + $0x68] sm:%s269] %v330
                %v332 = vld [vmem:[%s276 + $0xd8] sm:%s269]
                %333 = vst [vmem:[%s277 + $0x6c] sm:%s269] %v332
                %v334 = vld [vmem:[%s276 + $0xe0] sm:%s269]
                %335 = vst [vmem:[%s277 + $0x70] sm:%s269] %v334
                %v336 = vld [vmem:[%s276 + $0xe8] sm:%s269]
                %337 = vst [vmem:[%s277 + $0x74] sm:%s269] %v336
                %v338 = vld [vmem:[%s276 + $0xf0] sm:%s269]
                %339 = vst [vmem:[%s277 + $0x78] sm:%s269] %v338
                %v340 = vld [vmem:[%s276 + $0xf8] sm:%s269]
                %341 = vst [vmem:[%s277 + $0x7c] sm:%s269] %v340
              $region57: #{tpu_custom_call.1} parent=51 // loop_footer
                %s275 = sadd.s32 1, %s271
              $region58: #{tpu_custom_call.1} parent=51 // loop_footer_branch
                %270 = sbr.rel target = $region54
              $region59: #{tpu_custom_call.1} parent=51 // loop_exit
                _
            $region52: #{tpu_custom_call.1} parent=43 // pred_fallthru
              _
          $region44: #{tpu_custom_call.1} parent=39 // pred_fallthru
            _
          %426 = vnop
        $region40: #{tpu_custom_call.1} parent=35 // pred_fallthru
          _
        // Predicated region
        $region78: #{tpu_custom_call.1} parent=35 // pred_check
          %p427 = pneg %p103
        $region79: #{tpu_custom_call.1} parent=35 // pred_check_branch
          %429 = sbr.rel (%p427) target = $region81
        $region80: #{tpu_custom_call.1} parent=35 // pred_region
          %p430 = scmp.lt.s32.totalorder %s15, 1
          %s431 = scalar_select %p430, %s15, 1
          %s432 = scalar_lea.vmem %s3, %s431
        $region81: #{tpu_custom_call.1} parent=35 // pred_fallthru
          _
        // Predicated region
        $region82: #{tpu_custom_call.1} parent=35 // pred_check
          %p433 = pneg %p129
        $region83: #{tpu_custom_call.1} parent=35 // pred_check_branch
          %435 = sbr.rel (%p433) target = $region85
        $region84: #{tpu_custom_call.1} parent=35 // pred_region
          %s436 = smul.u32 16, %s15
          %p437 = scmp.lt.s32.totalorder %s436, 31
          %s438 = scalar_select %p437, %s436, 31
          %s439 = smul.addr %s438, 2
          %s440 = smul.addr %s439, 4
          %s441 = scalar_lea.vmem %s4, %s440
          %s442 = smul.u32 16, %s15
        $region85: #{tpu_custom_call.1} parent=35 // pred_fallthru
          _
      $region36: #{tpu_custom_call.1} parent=5 // pred_fallthru
        _
      %p443 = scmp.le.s32.totalorder 1, %s15
      %p444 = scmp.lt.s32.totalorder %s15, 3
      %p445 = pnand %p443, %p444
      %p446 = pneg %p445
      // Predicated region
      $region86: #{tpu_custom_call.1} parent=5 // pred_check
        _
      $region87: #{tpu_custom_call.1} parent=5 // pred_check_branch
        %448 = sbr.rel (%p445) target = $region89
      $region88: #{tpu_custom_call.1} parent=5 // pred_region
        %s449 = ssub.s32 %s15, 1
        %s450 = sand.u32 %s70, 1
        %s451 = sand.u32 %s70, 1
        %s452 = smul.addr %s451, 128
        %s453 = scalar_lea.vmem [#allocation4], %s452
        // Predicated region
        $region90: #{tpu_custom_call.1} parent=88 // pred_check
          %p454 = pneg %p83
        $region91: #{tpu_custom_call.1} parent=88 // pred_check_branch
          %456 = sbr.rel (%p454) target = $region93
        $region92: #{tpu_custom_call.1} parent=88 // pred_region
          _
        $region93: #{tpu_custom_call.1} parent=88 // pred_fallthru
          _
        %p457 = pneg %p36
        %p458 = pneg %p33
        %p459 = pneg %p57
        %p460 = pneg %p54
        %s461 = sand.u32 %s70, 1
        %s462 = sand.u32 %s70, 1
        %s463 = smul.addr %s462, 128
        %s464 = scalar_lea.vmem [#allocation4], %s463
        %p465 = pneg %p83
        %p466 = pneg %p80
        %p467 = scmp.lt.s32.totalorder %s20, 1
        %s468 = scalar_select %p467, %s20, 1
        %s469 = scalar_lea.vmem %s3, %s468
        %p470 = pneg %p109
        %p471 = pneg %p106
        %s472 = smul.u32 16, %s20
        %p473 = scmp.lt.s32.totalorder %s472, 31
        %s474 = scalar_select %p473, %s472, 31
        %s475 = smul.addr %s474, 2
        %s476 = smul.addr %s475, 4
        %s477 = scalar_lea.vmem %s4, %s476
        %p478 = pneg %p135
        %p479 = pneg %p132
        %p480 = pneg %p156
        %p481 = pneg %p153
        %p482 = pneg %p177
        %p483 = pneg %p174
        %p484 = pneg %p198
        %p485 = pneg %p195
        %p486 = pneg %p219
        %p487 = pneg %p216
        %p488 = scmp.lt.s32.totalorder %s20, 1
        %s489 = scalar_select %p488, %s20, 1
        %s490 = scalar_lea.vmem %s3, %s489
        %s491 = smul.u32 16, %s20
        %p492 = scmp.lt.s32.totalorder %s491, 31
        %s493 = scalar_select %p492, %s491, 31
        %s494 = smul.addr %s493, 2
        %s495 = smul.addr %s494, 4
        %s496 = scalar_lea.vmem %s4, %s495
        %s497 = smul.u32 16, %s20
        %p499 = scmp.eq.s32.totalorder %s20, 0
        // Predicated region
        $region94: #{tpu_custom_call.1} parent=88 // pred_check
          %p500 = pneg %p499
        $region95: #{tpu_custom_call.1} parent=88 // pred_check_branch
          %502 = sbr.rel (%p500) target = $region97
        $region96: #{tpu_custom_call.1} parent=88 // pred_region
          %v503 = vld [vmem:[%s1] sm:$0xff]
          %v504 = vld [vmem:[%s1 + $0x8] sm:$0xff]
          %v505 = vld [vmem:[%s1 + $0x10] sm:$0xff]
          %v506 = vld [vmem:[%s1 + $0x18] sm:$0xff]
          %v507 = vld [vmem:[%s1 + $0x20] sm:$0xff]
          %v508 = vld [vmem:[%s1 + $0x28] sm:$0xff]
          %v509 = vld [vmem:[%s1 + $0x30] sm:$0x1]
          %v510 = vld [vmem:[%s1 + $0x38] sm:$0xff]
          %v511 = vld [vmem:[%s1 + $0x40] sm:$0xff]
          %v512 = vld [vmem:[%s1 + $0x48] sm:$0xff]
          %v513 = vld [vmem:[%s1 + $0x50] sm:$0xff]
          %v514 = vld [vmem:[%s1 + $0x58] sm:$0xff]
          %v515 = vld [vmem:[%s1 + $0x60] sm:$0xff]
          %v516 = vld [vmem:[%s1 + $0x68] sm:$0x1]
          %v517 = vld [vmem:[%s1 + $0x70] sm:$0xff]
          %v518 = vld [vmem:[%s1 + $0x78] sm:$0xff]
          %v519 = vld [vmem:[%s1 + $0x80] sm:$0xff]
          %v520 = vld [vmem:[%s1 + $0x88] sm:$0xff]
          %v521 = vld [vmem:[%s1 + $0x90] sm:$0xff]
          %v522 = vld [vmem:[%s1 + $0x98] sm:$0xff]
          %v523 = vld [vmem:[%s1 + $0xa0] sm:$0x1]
          %v524 = vld [vmem:[%s1 + $0xa8] sm:$0xff]
          %v525 = vld [vmem:[%s1 + $0xb0] sm:$0xff]
          %v526 = vld [vmem:[%s1 + $0xb8] sm:$0xff]
          %v527 = vld [vmem:[%s1 + $0xc0] sm:$0xff]
          %v528 = vld [vmem:[%s1 + $0xc8] sm:$0xff]
          %v529 = vld [vmem:[%s1 + $0xd0] sm:$0xff]
          %v530 = vld [vmem:[%s1 + $0xd8] sm:$0x1]
          %v531 = vld [vmem:[%s1 + $0xe0] sm:$0xff]
          %v532 = vld [vmem:[%s1 + $0xe8] sm:$0xff]
          %v533 = vld [vmem:[%s1 + $0xf0] sm:$0xff]
          %v534 = vld [vmem:[%s1 + $0xf8] sm:$0xff]
          %v535 = vld [vmem:[%s1 + $0x100] sm:$0xff]
          %v536 = vld [vmem:[%s1 + $0x108] sm:$0xff]
          %v537 = vld [vmem:[%s1 + $0x110] sm:$0x1]
          %v538 = vld [vmem:[%s1 + $0x118] sm:$0xff]
          %v539 = vld [vmem:[%s1 + $0x120] sm:$0xff]
          %v540 = vld [vmem:[%s1 + $0x128] sm:$0xff]
          %v541 = vld [vmem:[%s1 + $0x130] sm:$0xff]
          %v542 = vld [vmem:[%s1 + $0x138] sm:$0xff]
          %v543 = vld [vmem:[%s1 + $0x140] sm:$0xff]
          %v544 = vld [vmem:[%s1 + $0x148] sm:$0x1]
          %v545 = vld [vmem:[%s1 + $0x150] sm:$0xff]
          %v546 = vld [vmem:[%s1 + $0x158] sm:$0xff]
          %v547 = vld [vmem:[%s1 + $0x160] sm:$0xff]
          %v548 = vld [vmem:[%s1 + $0x168] sm:$0xff]
          %v549 = vld [vmem:[%s1 + $0x170] sm:$0xff]
          %v550 = vld [vmem:[%s1 + $0x178] sm:$0xff]
          %v551 = vld [vmem:[%s1 + $0x180] sm:$0x1]
          %v552 = vld [vmem:[%s1 + $0x188] sm:$0xff]
          %v553 = vld [vmem:[%s1 + $0x190] sm:$0xff]
          %v554 = vld [vmem:[%s1 + $0x198] sm:$0xff]
          %v555 = vld [vmem:[%s1 + $0x1a0] sm:$0xff]
          %v556 = vld [vmem:[%s1 + $0x1a8] sm:$0xff]
          %v557 = vld [vmem:[%s1 + $0x1b0] sm:$0xff]
          %v558 = vld [vmem:[%s1 + $0x1b8] sm:$0x1]
          %v559 = vmax.f32 %v503, %v504
          %v560 = vmax.f32 %v559, %v505
          %v561 = vmax.f32 %v560, %v506
          %v562 = vmax.f32 %v561, %v507
          %v563 = vmax.f32 %v562, %v508
          %vm564 = vcmask 1040384
          %v565 = vsel %vm564, %v509, -inf
          %v566 = vmax.f32 %v563, %v565
          %v567 = vrot.slane %v566, 4
          %v568 = vmax.f32 %v566, %v567
          %v569 = vrot.slane %v568, 2
          %v570 = vmax.f32 %v568, %v569
          %v571 = vrot.slane %v570, 1
          %v572 = vmax.f32 %v570, %v571
          %v573 = vmax.f32 %v510, %v511
          %v574 = vmax.f32 %v573, %v512
          %v575 = vmax.f32 %v574, %v513
          %v576 = vmax.f32 %v575, %v514
          %v577 = vmax.f32 %v576, %v515
          %v578 = vsel %vm564, %v516, -inf
          %v579 = vmax.f32 %v577, %v578
          %v580 = vrot.slane %v579, 4
          %v581 = vmax.f32 %v579, %v580
          %v582 = vrot.slane %v581, 2
          %v583 = vmax.f32 %v581, %v582
          %v584 = vrot.slane %v583, 1
          %v585 = vmax.f32 %v583, %v584
          %v586 = vmax.f32 %v517, %v518
          %v587 = vmax.f32 %v586, %v519
          %v588 = vmax.f32 %v587, %v520
          %v589 = vmax.f32 %v588, %v521
          %v590 = vmax.f32 %v589, %v522
          %v591 = vsel %vm564, %v523, -inf
          %v592 = vmax.f32 %v590, %v591
          %v593 = vrot.slane %v592, 4
          %v594 = vmax.f32 %v592, %v593
          %v595 = vrot.slane %v594, 2
          %v596 = vmax.f32 %v594, %v595
          %v597 = vrot.slane %v596, 1
          %v598 = vmax.f32 %v596, %v597
          %v599 = vmax.f32 %v524, %v525
          %v600 = vmax.f32 %v599, %v526
          %v601 = vmax.f32 %v600, %v527
          %v602 = vmax.f32 %v601, %v528
          %v603 = vmax.f32 %v602, %v529
          %v604 = vsel %vm564, %v530, -inf
          %v605 = vmax.f32 %v603, %v604
          %v606 = vrot.slane %v605, 4
          %v607 = vmax.f32 %v605, %v606
          %v608 = vrot.slane %v607, 2
          %v609 = vmax.f32 %v607, %v608
          %v610 = vrot.slane %v609, 1
          %v611 = vmax.f32 %v609, %v610
          %v612 = vmax.f32 %v531, %v532
          %v613 = vmax.f32 %v612, %v533
          %v614 = vmax.f32 %v613, %v534
          %v615 = vmax.f32 %v614, %v535
          %v616 = vmax.f32 %v615, %v536
          %v617 = vsel %vm564, %v537, -inf
          %v618 = vmax.f32 %v616, %v617
          %v619 = vrot.slane %v618, 4
          %v620 = vmax.f32 %v618, %v619
          %v621 = vrot.slane %v620, 2
          %v622 = vmax.f32 %v620, %v621
          %v623 = vrot.slane %v622, 1
          %v624 = vmax.f32 %v622, %v623
          %v625 = vmax.f32 %v538, %v539
          %v626 = vmax.f32 %v625, %v540
          %v627 = vmax.f32 %v626, %v541
          %v628 = vmax.f32 %v627, %v542
          %v629 = vmax.f32 %v628, %v543
          %v630 = vsel %vm564, %v544, -inf
          %v631 = vmax.f32 %v629, %v630
          %v632 = vrot.slane %v631, 4
          %v633 = vmax.f32 %v631, %v632
          %v634 = vrot.slane %v633, 2
          %v635 = vmax.f32 %v633, %v634
          %v636 = vrot.slane %v635, 1
          %v637 = vmax.f32 %v635, %v636
          %v638 = vmax.f32 %v545, %v546
          %v639 = vmax.f32 %v638, %v547
          %v640 = vmax.f32 %v639, %v548
          %v641 = vmax.f32 %v640, %v549
          %v642 = vmax.f32 %v641, %v550
          %v643 = vsel %vm564, %v551, -inf
          %v644 = vmax.f32 %v642, %v643
          %v645 = vrot.slane %v644, 4
          %v646 = vmax.f32 %v644, %v645
          %v647 = vrot.slane %v646, 2
          %v648 = vmax.f32 %v646, %v647
          %v649 = vrot.slane %v648, 1
          %v650 = vmax.f32 %v648, %v649
          %v651 = vmax.f32 %v552, %v553
          %v652 = vmax.f32 %v651, %v554
          %v653 = vmax.f32 %v652, %v555
          %v654 = vmax.f32 %v653, %v556
          %v655 = vmax.f32 %v654, %v557
          %v656 = vsel %vm564, %v558, -inf
          %v657 = vmax.f32 %v655, %v656
          %v658 = vrot.slane %v657, 4
          %v659 = vmax.f32 %v657, %v658
          %v660 = vrot.slane %v659, 2
          %v661 = vmax.f32 %v659, %v660
          %v662 = vrot.slane %v661, 1
          %v663 = vmax.f32 %v661, %v662
          %v664 = vld [vmem:[%s0] sm:$0xff]
          %vm673 = vcmask 1041409
          %v674 = vsel %vm673, %v585, %v572
          %vm675 = vcmask 1042434
          %v676 = vsel %vm675, %v598, %v674
          %vm677 = vcmask 1043459
          %v678 = vsel %vm677, %v611, %v676
          %vm679 = vcmask 1044484
          %v680 = vsel %vm679, %v624, %v678
          %vm681 = vcmask 1045509
          %v682 = vsel %vm681, %v637, %v680
          %vm683 = vcmask 1046534
          %v684 = vsel %vm683, %v650, %v682
          %vm685 = vcmask 1047559
          %v686 = vsel %vm685, %v663, %v684
          %v688 = vpack.c.bf16 %v664, %v664
          %v689 = vpack.c.bf16 %v686, %v686
          %v692 = vunpack.c.l.b16 %v688
          %v693 = vunpack.c.l.b16 %v689
          %v694 = vpack.c.b16 %v693, %v692
          %696 = vst [vmem:[#allocation2] sm:$0xff] %v694
          %697 = vst [vmem:[#allocation3] sm:$0xff] 0.0
          %698 = vst [vmem:[#allocation3 + $0x8] sm:$0xff] 0.0
        $region97: #{tpu_custom_call.1} parent=88 // pred_fallthru
          _
        %v699 = vld [vmem:[#allocation2] sm:$0xff]
        %v700 = vld [vmem:[%s453] sm:$0xf]
        %v701 = vld [vmem:[%s453 + $0x4] sm:$0xf]
        %v702 = vld [vmem:[%s453 + $0x8] sm:$0xf]
        %v703 = vld [vmem:[%s453 + $0xc] sm:$0xf]
        %v704 = vld [vmem:[%s453 + $0x10] sm:$0xf]
        %v705 = vld [vmem:[%s453 + $0x14] sm:$0xf]
        %v706 = vld [vmem:[%s453 + $0x18] sm:$0xf]
        %v707 = vld [vmem:[%s453 + $0x1c] sm:$0xf]
        %v708 = vld [vmem:[%s453 + $0x20] sm:$0xf]
        %v709 = vld [vmem:[%s453 + $0x24] sm:$0xf]
        %v710 = vld [vmem:[%s453 + $0x28] sm:$0xf]
        %v711 = vld [vmem:[%s453 + $0x2c] sm:$0xf]
        %v712 = vld [vmem:[%s453 + $0x30] sm:$0xf]
        %v713 = vld [vmem:[%s453 + $0x34] sm:$0xf]
        %v714 = vld [vmem:[%s453 + $0x38] sm:$0xf]
        %v715 = vld [vmem:[%s453 + $0x3c] sm:$0xf]
        %v716 = vld [vmem:[%s453 + $0x40] sm:$0xf]
        %v717 = vld [vmem:[%s453 + $0x44] sm:$0xf]
        %v718 = vld [vmem:[%s453 + $0x48] sm:$0xf]
        %v719 = vld [vmem:[%s453 + $0x4c] sm:$0xf]
        %v720 = vld [vmem:[%s453 + $0x50] sm:$0xf]
        %v721 = vld [vmem:[%s453 + $0x54] sm:$0xf]
        %v722 = vld [vmem:[%s453 + $0x58] sm:$0xf]
        %v723 = vld [vmem:[%s453 + $0x5c] sm:$0xf]
        %v724 = vld [vmem:[%s453 + $0x60] sm:$0xf]
        %v725 = vld [vmem:[%s453 + $0x64] sm:$0xf]
        %v726 = vld [vmem:[%s453 + $0x68] sm:$0xf]
        %v727 = vld [vmem:[%s453 + $0x6c] sm:$0xf]
        %v728 = vld [vmem:[%s453 + $0x70] sm:$0xf]
        %v729 = vld [vmem:[%s453 + $0x74] sm:$0xf]
        %v730 = vld [vmem:[%s453 + $0x78] sm:$0xf]
        %v731 = vld [vmem:[%s453 + $0x7c] sm:$0xf]
        %v732 = vld [vmem:[%s490] sm:$0x1]
        %v734 = vlaneseq
        %v735 = vshrl.u32 %v734, 7
        %v736 = vsub.s32 0, %v735
        %v737 = vrot.slane %v732, %v736
        %v740 = vunpack.c.l.b16 %v699
        %v741 = vunpack.c.h.b16 %v699
        %v742 = vpack.c.b16 %v740, %v740
        %v743 = vpack.c.b16 %v741, %v741
        %v778 = vunpack.c.l.b16 %v700
        %v779 = vunpack.c.l.b16 %v701
        %v780 = vunpack.c.l.b16 %v702
        %v781 = vunpack.c.l.b16 %v703
        %v782 = vunpack.c.l.b16 %v704
        %v783 = vunpack.c.l.b16 %v705
        %v784 = vunpack.c.l.b16 %v706
        %v785 = vunpack.c.l.b16 %v707
        %v786 = vunpack.c.l.b16 %v708
        %v787 = vunpack.c.l.b16 %v709
        %v788 = vunpack.c.l.b16 %v710
        %v789 = vunpack.c.l.b16 %v711
        %v790 = vunpack.c.l.b16 %v712
        %v791 = vunpack.c.l.b16 %v713
        %v792 = vunpack.c.l.b16 %v714
        %v793 = vunpack.c.l.b16 %v715
        %v794 = vunpack.c.l.b16 %v716
        %v795 = vunpack.c.l.b16 %v717
        %v796 = vunpack.c.l.b16 %v718
        %v797 = vunpack.c.l.b16 %v719
        %v798 = vunpack.c.l.b16 %v720
        %v799 = vunpack.c.l.b16 %v721
        %v800 = vunpack.c.l.b16 %v722
        %v801 = vunpack.c.l.b16 %v723
        %v802 = vunpack.c.l.b16 %v724
        %v803 = vunpack.c.l.b16 %v725
        %v804 = vunpack.c.l.b16 %v726
        %v805 = vunpack.c.l.b16 %v727
        %v806 = vunpack.c.l.b16 %v728
        %v807 = vunpack.c.l.b16 %v729
        %v808 = vunpack.c.l.b16 %v730
        %v809 = vunpack.c.l.b16 %v731
        %v810 = vpack.c.b16 %v779, %v778
        %v811 = vpack.c.b16 %v781, %v780
        %v812 = vpack.c.b16 %v783, %v782
        %v813 = vpack.c.b16 %v785, %v784
        %v814 = vpack.c.b16 %v787, %v786
        %v815 = vpack.c.b16 %v789, %v788
        %v816 = vpack.c.b16 %v791, %v790
        %v817 = vpack.c.b16 %v793, %v792
        %v818 = vpack.c.b16 %v795, %v794
        %v819 = vpack.c.b16 %v797, %v796
        %v820 = vpack.c.b16 %v799, %v798
        %v821 = vpack.c.b16 %v801, %v800
        %v822 = vpack.c.b16 %v803, %v802
        %v823 = vpack.c.b16 %v805, %v804
        %v824 = vpack.c.b16 %v807, %v806
        %v825 = vpack.c.b16 %v809, %v808
        %842 = vmatprep.subr.bf16.mxu0 0
        %843 = vmatpush1.bf16.msra.mxu0 %v817
        %844 = vmatprep.subr.bf16.mxu0 0
        %845 = vmatpush1.bf16.msra.mxu0 %v816
        %846 = vmatprep.subr.bf16.mxu0 0
        %847 = vmatpush1.bf16.msra.mxu0 %v815
        %848 = vmatprep.subr.bf16.mxu0 0
        %849 = vmatpush1.bf16.msra.mxu0 %v814
        %850 = vmatprep.subr.bf16.mxu0 0
        %851 = vmatpush1.bf16.msra.mxu0 %v813
        %852 = vmatprep.subr.bf16.mxu0 0
        %853 = vmatpush1.bf16.msra.mxu0 %v812
        %854 = vmatprep.subr.bf16.mxu0 0
        %855 = vmatpush1.bf16.msra.mxu0 %v811
        %856 = vmatprep.subr.bf16.mxu0 0
        %857 = vmatpush1.bf16.msra.mxu0 %v810
        %858 = vmatprep.subr.bf16.mxu0 0
        %859 = vmatpush2.bf16.msra.mxu0 %v825
        %860 = vmatprep.subr.bf16.mxu0 0
        %861 = vmatpush2.bf16.msra.mxu0 %v824
        %862 = vmatprep.subr.bf16.mxu0 0
        %863 = vmatpush2.bf16.msra.mxu0 %v823
        %864 = vmatprep.subr.bf16.mxu0 0
        %865 = vmatpush2.bf16.msra.mxu0 %v822
        %866 = vmatprep.subr.bf16.mxu0 0
        %867 = vmatpush2.bf16.msra.mxu0 %v821
        %868 = vmatprep.subr.bf16.mxu0 0
        %869 = vmatpush2.bf16.msra.mxu0 %v820
        %870 = vmatprep.subr.bf16.mxu0 0
        %871 = vmatpush2.bf16.msra.mxu0 %v819
        %872 = vmatprep.subr.bf16.mxu0 0
        %873 = vmatpush2.bf16.msra.mxu0 %v818
        %874 = vmatprep.mubr.bf16.mxu0 %v743
        %875 = vmatmul.mubr.bf16.gmra.mxu0 %v742
        %v876 = vpop.f32.mrf.mxu0
        %v877 = vadd.f32 %v737, %v876
        %v878 = vpop.f32.mrf.mxu0
        %v879 = vpop.f32.mrf.mxu0
        %v880 = vpop.f32.mrf.mxu0
        %881 = vdwg.mxu0
        %v882 = vld [vmem:[#allocation3] sm:$0xff]
        %v883 = vld [vmem:[#allocation3 + $0x8] sm:$0xff]
        %v884 = vpack.c.bf16 %v877, %v877
        %v885 = vld [vmem:[%s496] sm:$0xff]
        %v886 = vld [vmem:[%s496 + $0x8] sm:$0xff]
        %v887 = vld [vmem:[%s496 + $0x10] sm:$0xff]
        %v888 = vld [vmem:[%s496 + $0x18] sm:$0xff]
        %v889 = vld [vmem:[%s496 + $0x20] sm:$0xff]
        %v890 = vld [vmem:[%s496 + $0x28] sm:$0xff]
        %v891 = vld [vmem:[%s496 + $0x30] sm:$0xff]
        %v892 = vld [vmem:[%s496 + $0x38] sm:$0xff]
        %v893 = vld [vmem:[%s496 + $0x40] sm:$0xff]
        %v894 = vld [vmem:[%s496 + $0x48] sm:$0xff]
        %v895 = vld [vmem:[%s496 + $0x50] sm:$0xff]
        %v896 = vld [vmem:[%s496 + $0x58] sm:$0xff]
        %v897 = vld [vmem:[%s496 + $0x60] sm:$0xff]
        %v898 = vld [vmem:[%s496 + $0x68] sm:$0xff]
        %v899 = vld [vmem:[%s496 + $0x70] sm:$0xff]
        %v900 = vld [vmem:[%s496 + $0x78] sm:$0xff]
        %v917 = vunpack.c.l.b16 %v885
        %v918 = vunpack.c.h.b16 %v885
        %v919 = vunpack.c.l.b16 %v886
        %v920 = vunpack.c.h.b16 %v886
        %v921 = vunpack.c.l.b16 %v887
        %v922 = vunpack.c.h.b16 %v887
        %v923 = vunpack.c.l.b16 %v888
        %v924 = vunpack.c.h.b16 %v888
        %v925 = vunpack.c.l.b16 %v889
        %v926 = vunpack.c.h.b16 %v889
        %v927 = vunpack.c.l.b16 %v890
        %v928 = vunpack.c.h.b16 %v890
        %v929 = vunpack.c.l.b16 %v891
        %v930 = vunpack.c.h.b16 %v891
        %v931 = vunpack.c.l.b16 %v892
        %v932 = vunpack.c.h.b16 %v892
        %v933 = vunpack.c.l.b16 %v893
        %v934 = vunpack.c.h.b16 %v893
        %v935 = vunpack.c.l.b16 %v894
        %v936 = vunpack.c.h.b16 %v894
        %v937 = vunpack.c.l.b16 %v895
        %v938 = vunpack.c.h.b16 %v895
        %v939 = vunpack.c.l.b16 %v896
        %v940 = vunpack.c.h.b16 %v896
        %v941 = vunpack.c.l.b16 %v897
        %v942 = vunpack.c.h.b16 %v897
        %v943 = vunpack.c.l.b16 %v898
        %v944 = vunpack.c.h.b16 %v898
        %v945 = vunpack.c.l.b16 %v899
        %v946 = vunpack.c.h.b16 %v899
        %v947 = vunpack.c.l.b16 %v900
        %v948 = vunpack.c.h.b16 %v900
        %v949 = vpack.c.b16 %v919, %v917
        %v950 = vpack.c.b16 %v920, %v918
        %v951 = vpack.c.b16 %v923, %v921
        %v952 = vpack.c.b16 %v924, %v922
        %v953 = vpack.c.b16 %v927, %v925
        %v954 = vpack.c.b16 %v928, %v926
        %v955 = vpack.c.b16 %v931, %v929
        %v956 = vpack.c.b16 %v932, %v930
        %v957 = vpack.c.b16 %v935, %v933
        %v958 = vpack.c.b16 %v936, %v934
        %v959 = vpack.c.b16 %v939, %v937
        %v960 = vpack.c.b16 %v940, %v938
        %v961 = vpack.c.b16 %v943, %v941
        %v962 = vpack.c.b16 %v944, %v942
        %v963 = vpack.c.b16 %v947, %v945
        %v964 = vpack.c.b16 %v948, %v946
        %981 = vmatprep.subr.bf16.mxu0 %v964
        %982 = vmatpush1.bf16.msra.mxu0 %v963
        %983 = vmatprep.subr.bf16.mxu0 %v962
        %984 = vmatpush1.bf16.msra.mxu0 %v961
        %985 = vmatprep.subr.bf16.mxu0 %v960
        %986 = vmatpush1.bf16.msra.mxu0 %v959
        %987 = vmatprep.subr.bf16.mxu0 %v958
        %988 = vmatpush1.bf16.msra.mxu0 %v957
        %989 = vmatprep.subr.bf16.mxu0 %v956
        %990 = vmatpush1.bf16.msra.mxu0 %v955
        %991 = vmatprep.subr.bf16.mxu0 %v954
        %992 = vmatpush1.bf16.msra.mxu0 %v953
        %993 = vmatprep.subr.bf16.mxu0 %v952
        %994 = vmatpush1.bf16.msra.mxu0 %v951
        %995 = vmatprep.subr.bf16.mxu0 %v950
        %996 = vmatpush1.bf16.msra.mxu0 %v949
        %997 = vmatprep.subr.bf16.mxu0 0
        %998 = vmatpush2.bf16.msra.mxu0 0
        %999 = vmatprep.subr.bf16.mxu0 0
        %1000 = vmatpush2.bf16.msra.mxu0 0
        %1001 = vmatprep.subr.bf16.mxu0 0
        %1002 = vmatpush2.bf16.msra.mxu0 0
        %1003 = vmatprep.subr.bf16.mxu0 0
        %1004 = vmatpush2.bf16.msra.mxu0 0
        %1005 = vmatprep.subr.bf16.mxu0 0
        %1006 = vmatpush2.bf16.msra.mxu0 0
        %1007 = vmatprep.subr.bf16.mxu0 0
        %1008 = vmatpush2.bf16.msra.mxu0 0
        %1009 = vmatprep.subr.bf16.mxu0 0
        %1010 = vmatpush2.bf16.msra.mxu0 0
        %1011 = vmatprep.subr.bf16.mxu0 0
        %1012 = vmatpush2.bf16.msra.mxu0 0
        %1013 = vmatprep.mubr.bf16.mxu0 0
        %1014 = vmatmul.mubr.bf16.gmra.mxu0 %v884
        %v1015 = vpop.f32.mrf.mxu0
        %v1016 = vadd.f32 0.0, %v1015
        %v1017 = vpop.f32.mrf.mxu0
        %v1018 = vadd.f32 0.0, %v1017
        %v1019 = vpop.f32.mrf.mxu0
        %v1020 = vpop.f32.mrf.mxu0
        %1021 = vdwg.mxu0
        %v1022 = vadd.f32 %v882, %v1016
        %v1023 = vadd.f32 %v883, %v1018
        %1024 = vst [vmem:[#allocation3] sm:$0xff] %v1022
        %1025 = vst [vmem:[#allocation3 + $0x8] sm:$0xff] %v1023
        %p1026 = scmp.eq.s32.totalorder %s20, 1
        // Predicated region
        $region98: #{tpu_custom_call.1} parent=88 // pred_check
          %p1027 = pneg %p1026
        $region99: #{tpu_custom_call.1} parent=88 // pred_check_branch
          %1029 = sbr.rel (%p1027) target = $region101
        $region100: #{tpu_custom_call.1} parent=88 // pred_region
          %v1030 = vld [vmem:[#allocation3] sm:$0xff]
          %v1031 = vld [vmem:[#allocation3 + $0x8] sm:$0xff]
          %v1032 = vld [vmem:[%s5] sm:$0x3]
          %v1034 = vlaneseq
          %v1035 = vshrl.u32 %v1034, 7
          %v1036 = vsub.s32 0, %v1035
          %v1037 = vrot.slane %v1032, %v1036
          %v1038 = vlaneseq
          %v1039 = vshrl.u32 %v1038, 7
          %v1040 = vsub.s32 1, %v1039
          %v1041 = vrot.slane %v1032, %v1040
          %v1044 = vadd.f32 %v1030, %v1037
          %v1045 = vadd.f32 %v1031, %v1041
          %v1046 = vpack.c.bf16 %v1044, %v1044
          %v1047 = vpack.c.bf16 %v1045, %v1045
          %v1048 = vld [vmem:[%s6] sm:$0xf]
          %v1049 = vld [vmem:[%s6 + $0x4] sm:$0xf]
          %v1050 = vld [vmem:[%s6 + $0x8] sm:$0xf]
          %v1051 = vld [vmem:[%s6 + $0xc] sm:$0xf]
          %v1052 = vld [vmem:[%s6 + $0x10] sm:$0xf]
          %v1053 = vld [vmem:[%s6 + $0x14] sm:$0xf]
          %v1054 = vld [vmem:[%s6 + $0x18] sm:$0xf]
          %v1055 = vld [vmem:[%s6 + $0x1c] sm:$0xf]
          %v1056 = vld [vmem:[%s6 + $0x20] sm:$0xf]
          %v1057 = vld [vmem:[%s6 + $0x24] sm:$0xf]
          %v1058 = vld [vmem:[%s6 + $0x28] sm:$0xf]
          %v1059 = vld [vmem:[%s6 + $0x2c] sm:$0xf]
          %v1060 = vld [vmem:[%s6 + $0x30] sm:$0xf]
          %v1061 = vld [vmem:[%s6 + $0x34] sm:$0xf]
          %v1062 = vld [vmem:[%s6 + $0x38] sm:$0xf]
          %v1063 = vld [vmem:[%s6 + $0x3c] sm:$0xf]
          %v1064 = vld [vmem:[%s6 + $0x40] sm:$0xf]
          %v1065 = vld [vmem:[%s6 + $0x44] sm:$0xf]
          %v1066 = vld [vmem:[%s6 + $0x48] sm:$0xf]
          %v1067 = vld [vmem:[%s6 + $0x4c] sm:$0xf]
          %v1068 = vld [vmem:[%s6 + $0x50] sm:$0xf]
          %v1069 = vld [vmem:[%s6 + $0x54] sm:$0xf]
          %v1070 = vld [vmem:[%s6 + $0x58] sm:$0xf]
          %v1071 = vld [vmem:[%s6 + $0x5c] sm:$0xf]
          %v1072 = vld [vmem:[%s6 + $0x60] sm:$0xf]
          %v1073 = vld [vmem:[%s6 + $0x64] sm:$0xf]
          %v1074 = vld [vmem:[%s6 + $0x68] sm:$0xf]
          %v1075 = vld [vmem:[%s6 + $0x6c] sm:$0xf]
          %v1076 = vld [vmem:[%s6 + $0x70] sm:$0xf]
          %v1077 = vld [vmem:[%s6 + $0x74] sm:$0xf]
          %v1078 = vld [vmem:[%s6 + $0x78] sm:$0xf]
          %v1079 = vld [vmem:[%s6 + $0x7c] sm:$0xf]
          %v1080 = vld [vmem:[%s7] sm:$0x1]
          %v1082 = vlaneseq
          %v1083 = vshrl.u32 %v1082, 7
          %v1084 = vsub.s32 0, %v1083
          %v1085 = vrot.slane %v1080, %v1084
          %v1119 = vunpack.c.l.b16 %v1048
          %v1120 = vunpack.c.l.b16 %v1049
          %v1121 = vunpack.c.l.b16 %v1050
          %v1122 = vunpack.c.l.b16 %v1051
          %v1123 = vunpack.c.l.b16 %v1052
          %v1124 = vunpack.c.l.b16 %v1053
          %v1125 = vunpack.c.l.b16 %v1054
          %v1126 = vunpack.c.l.b16 %v1055
          %v1127 = vunpack.c.l.b16 %v1056
          %v1128 = vunpack.c.l.b16 %v1057
          %v1129 = vunpack.c.l.b16 %v1058
          %v1130 = vunpack.c.l.b16 %v1059
          %v1131 = vunpack.c.l.b16 %v1060
          %v1132 = vunpack.c.l.b16 %v1061
          %v1133 = vunpack.c.l.b16 %v1062
          %v1134 = vunpack.c.l.b16 %v1063
          %v1135 = vunpack.c.l.b16 %v1064
          %v1136 = vunpack.c.l.b16 %v1065
          %v1137 = vunpack.c.l.b16 %v1066
          %v1138 = vunpack.c.l.b16 %v1067
          %v1139 = vunpack.c.l.b16 %v1068
          %v1140 = vunpack.c.l.b16 %v1069
          %v1141 = vunpack.c.l.b16 %v1070
          %v1142 = vunpack.c.l.b16 %v1071
          %v1143 = vunpack.c.l.b16 %v1072
          %v1144 = vunpack.c.l.b16 %v1073
          %v1145 = vunpack.c.l.b16 %v1074
          %v1146 = vunpack.c.l.b16 %v1075
          %v1147 = vunpack.c.l.b16 %v1076
          %v1148 = vunpack.c.l.b16 %v1077
          %v1149 = vunpack.c.l.b16 %v1078
          %v1150 = vunpack.c.l.b16 %v1079
          %v1151 = vpack.c.b16 %v1120, %v1119
          %v1152 = vpack.c.b16 %v1122, %v1121
          %v1153 = vpack.c.b16 %v1124, %v1123
          %v1154 = vpack.c.b16 %v1126, %v1125
          %v1155 = vpack.c.b16 %v1128, %v1127
          %v1156 = vpack.c.b16 %v1130, %v1129
          %v1157 = vpack.c.b16 %v1132, %v1131
          %v1158 = vpack.c.b16 %v1134, %v1133
          %v1159 = vpack.c.b16 %v1136, %v1135
          %v1160 = vpack.c.b16 %v1138, %v1137
          %v1161 = vpack.c.b16 %v1140, %v1139
          %v1162 = vpack.c.b16 %v1142, %v1141
          %v1163 = vpack.c.b16 %v1144, %v1143
          %v1164 = vpack.c.b16 %v1146, %v1145
          %v1165 = vpack.c.b16 %v1148, %v1147
          %v1166 = vpack.c.b16 %v1150, %v1149
          %1183 = vmatprep.subr.bf16.mxu0 0
          %1184 = vmatpush1.bf16.msra.mxu0 %v1158
          %1185 = vmatprep.subr.bf16.mxu0 0
          %1186 = vmatpush1.bf16.msra.mxu0 %v1157
          %1187 = vmatprep.subr.bf16.mxu0 0
          %1188 = vmatpush1.bf16.msra.mxu0 %v1156
          %1189 = vmatprep.subr.bf16.mxu0 0
          %1190 = vmatpush1.bf16.msra.mxu0 %v1155
          %1191 = vmatprep.subr.bf16.mxu0 0
          %1192 = vmatpush1.bf16.msra.mxu0 %v1154
          %1193 = vmatprep.subr.bf16.mxu0 0
          %1194 = vmatpush1.bf16.msra.mxu0 %v1153
          %1195 = vmatprep.subr.bf16.mxu0 0
          %1196 = vmatpush1.bf16.msra.mxu0 %v1152
          %1197 = vmatprep.subr.bf16.mxu0 0
          %1198 = vmatpush1.bf16.msra.mxu0 %v1151
          %1199 = vmatprep.subr.bf16.mxu0 0
          %1200 = vmatpush2.bf16.msra.mxu0 %v1166
          %1201 = vmatprep.subr.bf16.mxu0 0
          %1202 = vmatpush2.bf16.msra.mxu0 %v1165
          %1203 = vmatprep.subr.bf16.mxu0 0
          %1204 = vmatpush2.bf16.msra.mxu0 %v1164
          %1205 = vmatprep.subr.bf16.mxu0 0
          %1206 = vmatpush2.bf16.msra.mxu0 %v1163
          %1207 = vmatprep.subr.bf16.mxu0 0
          %1208 = vmatpush2.bf16.msra.mxu0 %v1162
          %1209 = vmatprep.subr.bf16.mxu0 0
          %1210 = vmatpush2.bf16.msra.mxu0 %v1161
          %1211 = vmatprep.subr.bf16.mxu0 0
          %1212 = vmatpush2.bf16.msra.mxu0 %v1160
          %1213 = vmatprep.subr.bf16.mxu0 0
          %1214 = vmatpush2.bf16.msra.mxu0 %v1159
          %1215 = vmatprep.mubr.bf16.mxu0 %v1047
          %1216 = vmatmul.mubr.bf16.gmra.mxu0 %v1046
          %v1217 = vpop.f32.mrf.mxu0
          %v1218 = vadd.f32 %v1085, %v1217
          %v1219 = vpop.f32.mrf.mxu0
          %v1220 = vpop.f32.mrf.mxu0
          %v1221 = vpop.f32.mrf.mxu0
          %1222 = vdwg.mxu0
          %1223 = vst [vmem:[#allocation5] sm:$0xff] %v1218
        $region101: #{tpu_custom_call.1} parent=88 // pred_fallthru
          _
        // Predicated region
        $region102: #{tpu_custom_call.1} parent=88 // pred_check
          %p1224 = pneg %p216
        $region103: #{tpu_custom_call.1} parent=88 // pred_check_branch
          %1226 = sbr.rel (%p1224) target = $region105
        $region104: #{tpu_custom_call.1} parent=88 // pred_region
          %s1228 = ssub.s32 128, 128
          %1229 = vsyncadd [#allocation6], %s1228
          %s1231 = sshll.u32 [#allocation5], 4
          %s1232 = int_to_ptr.vmem [resolvable:$true] %s1231
          %1234 = dma.vmem_to_hbm [thread:$0]  %s1232, 128, %s8, [#allocation6]
        $region105: #{tpu_custom_call.1} parent=88 // pred_fallthru
          _
        // Predicated region
        $region106: #{tpu_custom_call.1} parent=88 // pred_check
          %p1235 = pneg %p216
        $region107: #{tpu_custom_call.1} parent=88 // pred_check_branch
          %1237 = sbr.rel (%p1235) target = $region109
        $region108: #{tpu_custom_call.1} parent=88 // pred_region
          %1238 = dma.done [#allocation6], 128
        $region109: #{tpu_custom_call.1} parent=88 // pred_fallthru
          _
      $region89: #{tpu_custom_call.1} parent=5 // pred_fallthru
        _
      %p1239 = scmp.le.s32.totalorder 2, %s15
      // Predicated region
      $region110: #{tpu_custom_call.1} parent=5 // pred_check
        %p1240 = pneg %p1239
      $region111: #{tpu_custom_call.1} parent=5 // pred_check_branch
        %1242 = sbr.rel (%p1240) target = $region113
      $region112: #{tpu_custom_call.1} parent=5 // pred_region
        %s1243 = ssub.s32 %s15, 2
      $region113: #{tpu_custom_call.1} parent=5 // pred_fallthru
        _
    $region6: #{tpu_custom_call.1} parent=1 // loop_footer
      %s19 = sadd.s32 1, %s15
    $region7: #{tpu_custom_call.1} parent=1 // loop_footer_branch
      %14 = sbr.rel target = $region3
    $region8: #{tpu_custom_call.1} parent=1 // loop_exit
      _
    %1244 = vsyncpa [#allocation6], 1
    %s1245 = scalar_lea.sflag [#allocation6], 1
    %1246 = vsyncpa %s1245, 1

</llo_original>
